<compile_context>
chip_gen: v7x
topology: tpu7x:2x2x1
jax: 0.10.0
libtpu: 0.0.40
codegen_flags: <defaults>
</compile_context>

<pallas_src>
import jax
import jax.numpy as jnp
from jax.experimental import pallas as pl
from jax.experimental.pallas import tpu as pltpu


def mlp_kernel(x_ref, w1_ref, b1_ref, w2_ref, b2_ref, o_ref):
    """Fused: relu(W1 @ x + b1) -> W2 @ h + (x + b2).  x tile is [D, tile_n]."""
    x = x_ref[...]                                                        # [D, tile_n] f32
    h = jnp.dot(w1_ref[...], x, preferred_element_type=jnp.float32) + b1_ref[...]
    h = jnp.maximum(h, 0.0)                                               # ReLU on the VPU
    # TODO(synk): nn.Dropout(p=0.15) is treated as identity (eval-mode semantics).
    y = jnp.dot(w2_ref[...], h, preferred_element_type=jnp.float32)
    o_ref[...] = (y + (x + b2_ref[...])).astype(o_ref.dtype)              # bias + residual


def mlp_forward(x_nchw, w1, b1, w2, b2, *, tile_n=2048):
    """x_nchw: [B, D, N, W] (NCHW, as fed to the PyTorch 1x1 Conv2d).

    w1: [H, D], b1: [H], w2: [H, H], b2: [H]  -- PyTorch Conv2d weight layout
    ([out, in] with the 1x1 spatial dims squeezed).  Returns [B, H, N, W].
    Requires D == H (needed by the residual, as in the original module).
    """
    B, D, N, W = x_nchw.shape
    H = w1.shape[0]
    assert D == H, "residual link requires input_dim == hidden_dim"
    S = N * W

    # Contiguous reshape only (no transpose): channels stay on sublanes,
    # spatial positions land on the 128-lane axis.
    x3d = x_nchw.reshape(B, D, S)

    if S <= tile_n:
        tn = S                              # full-extent block: any S is legal
    else:
        tn = max(128, (tile_n // 128) * 128)  # lane-aligned tile; cdiv grid masks the tail

    grid = (B, pl.cdiv(S, tn))

    out = pl.pallas_call(
        mlp_kernel,
        out_shape=jax.ShapeDtypeStruct((B, H, S), x_nchw.dtype),
        grid_spec=pltpu.PrefetchScalarGridSpec(
            num_scalar_prefetch=0,
            grid=grid,
            in_specs=[
                pl.BlockSpec((None, D, tn), lambda b, j: (b, 0, j)),   # x tile (batch squeezed)
                pl.BlockSpec((H, D), lambda b, j: (0, 0)),             # W1 (resident)
                pl.BlockSpec((H, 1), lambda b, j: (0, 0)),             # b1
                pl.BlockSpec((H, H), lambda b, j: (0, 0)),             # W2 (resident)
                pl.BlockSpec((H, 1), lambda b, j: (0, 0)),             # b2
            ],
            out_specs=pl.BlockSpec((None, H, tn), lambda b, j: (b, 0, j)),
        ),
        compiler_params=pltpu.CompilerParams(
            dimension_semantics=("parallel", "parallel")),
    )(x3d, w1, b1.reshape(H, 1), w2, b2.reshape(H, 1))

    return out.reshape(B, H, N, W)


def _init_params(key, input_dim, hidden_dim, dtype=jnp.float32):
    """Deterministic PyTorch-Conv2d-like init (uniform with bound 1/sqrt(fan_in))."""
    k1, k2, k3, k4 = jax.random.split(key, 4)
    bound1 = 1.0 / jnp.sqrt(input_dim)
    bound2 = 1.0 / jnp.sqrt(hidden_dim)
    # PyTorch Conv2d weight layout [out, in] (1x1 spatial squeezed).
    w1 = jax.random.uniform(k1, (hidden_dim, input_dim), dtype, -bound1, bound1)
    b1 = jax.random.uniform(k2, (hidden_dim,), dtype, -bound1, bound1)
    w2 = jax.random.uniform(k3, (hidden_dim, hidden_dim), dtype, -bound2, bound2)
    b2 = jax.random.uniform(k4, (hidden_dim,), dtype, -bound2, bound2)
    return w1, b1, w2, b2


def _reference(x_nchw, w1, b1, w2, b2):
    """Pure-JAX reference of the PyTorch forward (dropout in eval mode)."""
    B, D, N, W = x_nchw.shape
    x = x_nchw.reshape(B, D, N * W)
    h = jnp.maximum(jnp.einsum('hd,bds->bhs', w1, x) + b1[None, :, None], 0.0)
    y = jnp.einsum('kh,bhs->bks', w2, h) + b2[None, :, None] + x
    return y.reshape(B, -1, N, W)


if __name__ == "__main__":
    key = jax.random.PRNGKey(0)
    kx, kp, kx2 = jax.random.split(key, 3)

    # --- small shape (STID usage: NCHW with width 1, input_dim == hidden_dim) ---
    B, D, N = 2, 32, 16
    H = D
    x = jax.random.normal(kx, (B, D, N, 1), dtype=jnp.float32)
    w1, b1, w2, b2 = _init_params(kp, D, H)

    out = jax.block_until_ready(mlp_forward(x, w1, b1, w2, b2))
    ref = _reference(x, w1, b1, w2, b2)
    assert out.shape == (B, H, N, 1), out.shape
    assert jnp.allclose(out, ref, atol=1e-5, rtol=1e-5), "mismatch vs reference (small)"

    # --- larger spatial extent: exercises lane tiling + ragged-tail masked store ---
    N2 = 300                                   # 300 = 2*128 + 44 -> ragged last tile
    x2 = jax.random.normal(kx2, (B, D, N2, 1), dtype=jnp.float32)
    out2 = jax.block_until_ready(mlp_forward(x2, w1, b1, w2, b2, tile_n=128))
    ref2 = _reference(x2, w1, b1, w2, b2)
    assert out2.shape == (B, H, N2, 1), out2.shape
    assert jnp.allclose(out2, ref2, atol=1e-5, rtol=1e-5), "mismatch vs reference (tiled)"

    print("KERNEL_OK")
</pallas_src>

<mosaic_0001>
module attributes {stable_mosaic.version = 11 : i64} {
  func.func @mlp_kernel(%arg0: i32, %arg1: i32, %arg2: memref<1x32x16xf32, #tpu.memory_space<vmem>>, %arg3: memref<32x32xf32, #tpu.memory_space<vmem>>, %arg4: memref<32x1xf32, #tpu.memory_space<vmem>>, %arg5: memref<32x32xf32, #tpu.memory_space<vmem>>, %arg6: memref<32x1xf32, #tpu.memory_space<vmem>>, %arg7: memref<1x32x16xf32, #tpu.memory_space<vmem>>) attributes {dimension_semantics = [#tpu.dimension_semantics<parallel>, #tpu.dimension_semantics<parallel>], iteration_bounds = array<i64: 2, 1>, scalar_prefetch = 0 : i64, scratch_operands = 0 : i64, tpu.core_type = #tpu.core_type<tc>, window_params = [{transform_indices = @transform_0, window_bounds = array<i64: 1, 32, 16>}, {pipeline_mode = #tpu.pipeline_mode<synchronous>, transform_indices = @transform_1, window_bounds = array<i64: 32, 32>}, {pipeline_mode = #tpu.pipeline_mode<synchronous>, transform_indices = @transform_2, window_bounds = array<i64: 32, 1>}, {pipeline_mode = #tpu.pipeline_mode<synchronous>, transform_indices = @transform_3, window_bounds = array<i64: 32, 32>}, {pipeline_mode = #tpu.pipeline_mode<synchronous>, transform_indices = @transform_4, window_bounds = array<i64: 32, 1>}, {transform_indices = @transform_5, window_bounds = array<i64: 1, 32, 16>}]} {
    %c0 = arith.constant 0 : index
    %c0_0 = arith.constant 0 : index
    %c0_1 = arith.constant 0 : index
    %0 = vector.load %arg2[%c0, %c0_0, %c0_1] : memref<1x32x16xf32, #tpu.memory_space<vmem>>, vector<1x32x16xf32>
    %1 = vector.shape_cast %0 : vector<1x32x16xf32> to vector<32x16xf32>
    %c0_2 = arith.constant 0 : index
    %c0_3 = arith.constant 0 : index
    %2 = vector.load %arg3[%c0_2, %c0_3] : memref<32x32xf32, #tpu.memory_space<vmem>>, vector<32x32xf32>
    %cst = arith.constant dense<0.000000e+00> : vector<32x16xf32>
    %3 = tpu.matmul %2, %1, %cst {dimension_numbers = #tpu.dot_dimension_numbers<[1], [0], [0], [1], [0, 0, 1, 1], [], []>} : vector<32x32xf32>, vector<32x16xf32>, vector<32x16xf32> -> vector<32x16xf32>
    %c0_4 = arith.constant 0 : index
    %c0_5 = arith.constant 0 : index
    %4 = vector.load %arg4[%c0_4, %c0_5] : memref<32x1xf32, #tpu.memory_space<vmem>>, vector<32x1xf32>
    %5 = vector.broadcast %4 : vector<32x1xf32> to vector<32x16xf32>
    %6 = arith.addf %3, %5 : vector<32x16xf32>
    %cst_6 = arith.constant 0.000000e+00 : f32
    %7 = vector.broadcast %cst_6 : f32 to vector<32x16xf32>
    %8 = arith.maximumf %6, %7 : vector<32x16xf32>
    %c0_7 = arith.constant 0 : index
    %c0_8 = arith.constant 0 : index
    %9 = vector.load %arg5[%c0_7, %c0_8] : memref<32x32xf32, #tpu.memory_space<vmem>>, vector<32x32xf32>
    %cst_9 = arith.constant dense<0.000000e+00> : vector<32x16xf32>
    %10 = tpu.matmul %9, %8, %cst_9 {dimension_numbers = #tpu.dot_dimension_numbers<[1], [0], [0], [1], [0, 0, 1, 1], [], []>} : vector<32x32xf32>, vector<32x16xf32>, vector<32x16xf32> -> vector<32x16xf32>
    %c0_10 = arith.constant 0 : index
    %c0_11 = arith.constant 0 : index
    %11 = vector.load %arg6[%c0_10, %c0_11] : memref<32x1xf32, #tpu.memory_space<vmem>>, vector<32x1xf32>
    %12 = vector.broadcast %11 : vector<32x1xf32> to vector<32x16xf32>
    %13 = arith.addf %1, %12 : vector<32x16xf32>
    %14 = arith.addf %10, %13 : vector<32x16xf32>
    %c0_12 = arith.constant 0 : index
    %c0_13 = arith.constant 0 : index
    %c0_14 = arith.constant 0 : index
    %15 = vector.load %arg7[%c0_12, %c0_13, %c0_14] : memref<1x32x16xf32, #tpu.memory_space<vmem>>, vector<1x32x16xf32>
    %16 = vector.shape_cast %15 : vector<1x32x16xf32> to vector<32x16xf32>
    %17 = vector.shape_cast %14 : vector<32x16xf32> to vector<1x32x16xf32>
    tpu.vector_store %arg7[%c0_12, %c0_13, %c0_14], %17 {strides = array<i32>} : memref<1x32x16xf32, #tpu.memory_space<vmem>>, vector<1x32x16xf32>,
    return
  }
  func.func @transform_0(%arg0: i32, %arg1: i32) -> (i32, i32, i32) {
    %c0_i32 = arith.constant 0 : i32
    %c0_i32_0 = arith.constant 0 : i32
    return %arg0, %c0_i32, %arg1 : i32, i32, i32
  }
  func.func @transform_1(%arg0: i32, %arg1: i32) -> (i32, i32) {
    %c0_i32 = arith.constant 0 : i32
    %c0_i32_0 = arith.constant 0 : i32
    %c0_i32_1 = arith.constant 0 : i32
    return %c0_i32, %c0_i32_0 : i32, i32
  }
  func.func @transform_2(%arg0: i32, %arg1: i32) -> (i32, i32) {
    %c0_i32 = arith.constant 0 : i32
    %c0_i32_0 = arith.constant 0 : i32
    %c0_i32_1 = arith.constant 0 : i32
    return %c0_i32, %c0_i32_0 : i32, i32
  }
  func.func @transform_3(%arg0: i32, %arg1: i32) -> (i32, i32) {
    %c0_i32 = arith.constant 0 : i32
    %c0_i32_0 = arith.constant 0 : i32
    %c0_i32_1 = arith.constant 0 : i32
    return %c0_i32, %c0_i32_0 : i32, i32
  }
  func.func @transform_4(%arg0: i32, %arg1: i32) -> (i32, i32) {
    %c0_i32 = arith.constant 0 : i32
    %c0_i32_0 = arith.constant 0 : i32
    %c0_i32_1 = arith.constant 0 : i32
    return %c0_i32, %c0_i32_0 : i32, i32
  }
  func.func @transform_5(%arg0: i32, %arg1: i32) -> (i32, i32, i32) {
    %c0_i32 = arith.constant 0 : i32
    %c0_i32_0 = arith.constant 0 : i32
    return %arg0, %c0_i32, %arg1 : i32, i32, i32
  }
}

</mosaic_0001>

<llo_original>
// kernel: tpu_custom_call.1
$region0: #{tpu_custom_call.1}
  #allocation0 [shape = 'u32[]', space=smem, size = 0x4, offset = 0x4, fixed_abs, tag = 'smem constant byte address 0x4 - core index']
  #allocation1 [shape = 'u32[144,128]{1,0:T(1,128)}', space=vmem, size = 0x12000, scoped, tag = 'internal scratch']
  %s0 = inlined_call_operand.vmem [shape: f32[2,32,16], index: 0, kind: input, shape index: {}]
  %s1 = inlined_call_operand.vmem [shape: f32[32,32], index: 1, kind: input, shape index: {}]
  %s2 = inlined_call_operand.vmem [shape: f32[32,1], index: 2, kind: input, shape index: {}]
  %s3 = inlined_call_operand.vmem [shape: f32[32,32], index: 3, kind: input, shape index: {}]
  %s4 = inlined_call_operand.vmem [shape: f32[32,1], index: 4, kind: input, shape index: {}]
  %s5 = inlined_call_operand.vmem [shape: f32[2,32,16], index: 5, kind: output, shape index: {}]
  %s6 = sld [smem:[#allocation0]]
  $region53: #{tpu_custom_call.1} parent=0
    _
  %s8 = ssub.s32 1, %s6
  %s9 = scalar_select 0, %s8, %s6
  loop: start=0, step=1, limit=4
  $region2: #{tpu_custom_call.1} parent=0 // loop_pre_header
    _
  $region3: #{tpu_custom_call.1} parent=0 // loop_header
    %s11 = sphi 0, %s15
    %p12 = scmp.ge.s32.totalorder %s11, 4
    %s18 = sphi 0, %s30
    %s19 = sphi 0, %s26
    %s20 = sphi 0, %s18
    %s21 = sphi 0, %s19
    %s22 = sphi 0, %s20
    %s23 = sphi 0, %s21
    %s35 = sphi 0, %s37
    %s38 = sphi 0, %s35
    %s39 = sphi 0, %s38
    %s55 = sphi 0, %s39
    %s59 = sphi 0, %s59
    %s61 = sphi 0, %s59
    %s62 = sphi 0, %s61
    %s76 = sphi 0, %s62
    %s80 = sphi 0, %s80
    %s82 = sphi 0, %s80
    %s83 = sphi 0, %s82
    %s97 = sphi 0, %s83
    %s101 = sphi 0, %s101
    %s103 = sphi 0, %s101
    %s104 = sphi 0, %s103
    %s118 = sphi 0, %s104
    %s122 = sphi 0, %s122
    %s124 = sphi 0, %s122
    %s125 = sphi 0, %s124
    %s139 = sphi 0, %s125
    %s147 = sphi 0, %s149
    %s150 = sphi 0, %s147
    %s151 = sphi 0, %s150
    %s167 = sphi 0, %s151
  $region4: #{tpu_custom_call.1} parent=0 // loop_header_branch
    %14 = sbr.rel (%p12) target = $region8
  $region5: #{tpu_custom_call.1} parent=0 // loop_body
    %s16 = ssub.s32 %s11, 1
    %s17 = ssub.s32 %s11, 2
    %s24 = sadd.s32 1, %s19
    %p25 = scmp.ge.s32.totalorder %s24, 1
    %s26 = scalar_select %p25, 0, %s24
    %s27 = sadd.s32 1, %s18
    %s28 = scalar_select %p25, %s27, %s18
    %p29 = scmp.ge.s32.totalorder %s28, 2
    %s30 = scalar_select %p29, 0, %s28
    %s31 = ssub.s32 %s18, %s30
    %s32 = ssub.s32 %s19, %s26
    %s33 = sor.u32 %s31, %s32
    %p34 = scmp.eq.s32.totalorder %s33, 0
    %s36 = sadd.s32 %s35, 1
    %s37 = scalar_select %p34, %s35, %s36
    %p40 = pneg %p34
    %p41 = scmp.eq.s32.totalorder %s11, 1
    %p42 = por %p40, %p41
    %p43 = scmp.ne.s32.totalorder %s35, %s38
    %p44 = scmp.eq.s32.totalorder %s11, 0
    %p45 = por %p43, %p44
    %p46 = scmp.ne.s32.totalorder %s35, %s38
    %p47 = scmp.eq.s32.totalorder %s16, 1
    %p48 = por %p46, %p47
    %p49 = scmp.ne.s32.totalorder %s38, %s39
    %p50 = scmp.eq.s32.totalorder %s16, 0
    %p51 = por %p49, %p50
    %p52 = scmp.ne.s32.totalorder %s38, %s39
    %p53 = scmp.eq.s32.totalorder %s17, 1
    %p54 = por %p52, %p53
    %p56 = scmp.ne.s32.totalorder %s39, %s55
    %p57 = scmp.eq.s32.totalorder %s17, 0
    %p58 = por %p56, %p57
    %s60 = sadd.s32 %s59, 1
    %p63 = scmp.eq.s32.totalorder %s11, 1
    %p64 = scmp.ne.s32.totalorder %s59, %s61
    %p65 = scmp.eq.s32.totalorder %s11, 0
    %p66 = por %p64, %p65
    %p67 = scmp.ne.s32.totalorder %s59, %s61
    %p68 = scmp.eq.s32.totalorder %s16, 1
    %p69 = por %p67, %p68
    %p70 = scmp.ne.s32.totalorder %s61, %s62
    %p71 = scmp.eq.s32.totalorder %s16, 0
    %p72 = por %p70, %p71
    %p73 = scmp.ne.s32.totalorder %s61, %s62
    %p74 = scmp.eq.s32.totalorder %s17, 1
    %p75 = por %p73, %p74
    %p77 = scmp.ne.s32.totalorder %s62, %s76
    %p78 = scmp.eq.s32.totalorder %s17, 0
    %p79 = por %p77, %p78
    %s81 = sadd.s32 %s80, 1
    %p84 = scmp.eq.s32.totalorder %s11, 1
    %p85 = scmp.ne.s32.totalorder %s80, %s82
    %p86 = scmp.eq.s32.totalorder %s11, 0
    %p87 = por %p85, %p86
    %p88 = scmp.ne.s32.totalorder %s80, %s82
    %p89 = scmp.eq.s32.totalorder %s16, 1
    %p90 = por %p88, %p89
    %p91 = scmp.ne.s32.totalorder %s82, %s83
    %p92 = scmp.eq.s32.totalorder %s16, 0
    %p93 = por %p91, %p92
    %p94 = scmp.ne.s32.totalorder %s82, %s83
    %p95 = scmp.eq.s32.totalorder %s17, 1
    %p96 = por %p94, %p95
    %p98 = scmp.ne.s32.totalorder %s83, %s97
    %p99 = scmp.eq.s32.totalorder %s17, 0
    %p100 = por %p98, %p99
    %s102 = sadd.s32 %s101, 1
    %p105 = scmp.eq.s32.totalorder %s11, 1
    %p106 = scmp.ne.s32.totalorder %s101, %s103
    %p107 = scmp.eq.s32.totalorder %s11, 0
    %p108 = por %p106, %p107
    %p109 = scmp.ne.s32.totalorder %s101, %s103
    %p110 = scmp.eq.s32.totalorder %s16, 1
    %p111 = por %p109, %p110
    %p112 = scmp.ne.s32.totalorder %s103, %s104
    %p113 = scmp.eq.s32.totalorder %s16, 0
    %p114 = por %p112, %p113
    %p115 = scmp.ne.s32.totalorder %s103, %s104
    %p116 = scmp.eq.s32.totalorder %s17, 1
    %p117 = por %p115, %p116
    %p119 = scmp.ne.s32.totalorder %s104, %s118
    %p120 = scmp.eq.s32.totalorder %s17, 0
    %p121 = por %p119, %p120
    %s123 = sadd.s32 %s122, 1
    %p126 = scmp.eq.s32.totalorder %s11, 1
    %p127 = scmp.ne.s32.totalorder %s122, %s124
    %p128 = scmp.eq.s32.totalorder %s11, 0
    %p129 = por %p127, %p128
    %p130 = scmp.ne.s32.totalorder %s122, %s124
    %p131 = scmp.eq.s32.totalorder %s16, 1
    %p132 = por %p130, %p131
    %p133 = scmp.ne.s32.totalorder %s124, %s125
    %p134 = scmp.eq.s32.totalorder %s16, 0
    %p135 = por %p133, %p134
    %p136 = scmp.ne.s32.totalorder %s124, %s125
    %p137 = scmp.eq.s32.totalorder %s17, 1
    %p138 = por %p136, %p137
    %p140 = scmp.ne.s32.totalorder %s125, %s139
    %p141 = scmp.eq.s32.totalorder %s17, 0
    %p142 = por %p140, %p141
    %s143 = ssub.s32 %s18, %s30
    %s144 = ssub.s32 %s19, %s26
    %s145 = sor.u32 %s143, %s144
    %p146 = scmp.eq.s32.totalorder %s145, 0
    %s148 = sadd.s32 %s147, 1
    %s149 = scalar_select %p146, %s147, %s148
    %p152 = pneg %p146
    %p153 = scmp.eq.s32.totalorder %s11, 1
    %p154 = por %p152, %p153
    %p155 = scmp.ne.s32.totalorder %s147, %s150
    %p156 = scmp.eq.s32.totalorder %s11, 0
    %p157 = por %p155, %p156
    %p158 = scmp.ne.s32.totalorder %s147, %s150
    %p159 = scmp.eq.s32.totalorder %s16, 1
    %p160 = por %p158, %p159
    %p161 = scmp.ne.s32.totalorder %s150, %s151
    %p162 = scmp.eq.s32.totalorder %s16, 0
    %p163 = por %p161, %p162
    %p164 = scmp.ne.s32.totalorder %s150, %s151
    %p165 = scmp.eq.s32.totalorder %s17, 1
    %p166 = por %p164, %p165
    %p168 = scmp.ne.s32.totalorder %s151, %s167
    %p169 = scmp.eq.s32.totalorder %s17, 0
    %p170 = por %p168, %p169
    %p171 = scmp.le.s32.totalorder 1, %s11
    %p172 = scmp.lt.s32.totalorder %s11, 3
    %p173 = pnand %p171, %p172
    %p174 = pneg %p173
    // Predicated region
    $region9: #{tpu_custom_call.1} parent=5 // pred_check
      _
    $region10: #{tpu_custom_call.1} parent=5 // pred_check_branch
      %176 = sbr.rel (%p173) target = $region12
    $region11: #{tpu_custom_call.1} parent=5 // pred_region
      %s177 = ssub.s32 %s11, 1
      // Predicated region
      $region13: #{tpu_custom_call.1} parent=11 // pred_check
        %p178 = pneg %p72
      $region14: #{tpu_custom_call.1} parent=11 // pred_check_branch
        %180 = sbr.rel (%p178) target = $region16
      $region15: #{tpu_custom_call.1} parent=11 // pred_region
        _
      $region16: #{tpu_custom_call.1} parent=11 // pred_fallthru
        _
      // Predicated region
      $region17: #{tpu_custom_call.1} parent=11 // pred_check
        %p181 = pneg %p93
      $region18: #{tpu_custom_call.1} parent=11 // pred_check_branch
        %183 = sbr.rel (%p181) target = $region20
      $region19: #{tpu_custom_call.1} parent=11 // pred_region
        _
      $region20: #{tpu_custom_call.1} parent=11 // pred_fallthru
        _
      // Predicated region
      $region21: #{tpu_custom_call.1} parent=11 // pred_check
        %p184 = pneg %p114
      $region22: #{tpu_custom_call.1} parent=11 // pred_check_branch
        %186 = sbr.rel (%p184) target = $region24
      $region23: #{tpu_custom_call.1} parent=11 // pred_region
        _
      $region24: #{tpu_custom_call.1} parent=11 // pred_fallthru
        _
      // Predicated region
      $region25: #{tpu_custom_call.1} parent=11 // pred_check
        %p187 = pneg %p135
      $region26: #{tpu_custom_call.1} parent=11 // pred_check_branch
        %189 = sbr.rel (%p187) target = $region28
      $region27: #{tpu_custom_call.1} parent=11 // pred_region
        _
      $region28: #{tpu_custom_call.1} parent=11 // pred_fallthru
        _
    $region12: #{tpu_custom_call.1} parent=5 // pred_fallthru
      _
    %p190 = scmp.lt.s32.totalorder %s11, 2
    // Predicated region
    $region29: #{tpu_custom_call.1} parent=5 // pred_check
      %p191 = pneg %p190
    $region30: #{tpu_custom_call.1} parent=5 // pred_check_branch
      %193 = sbr.rel (%p191) target = $region32
    $region31: #{tpu_custom_call.1} parent=5 // pred_region
      // Predicated region
      $region33: #{tpu_custom_call.1} parent=31 // pred_check
        %p194 = pneg %p45
      $region34: #{tpu_custom_call.1} parent=31 // pred_check_branch
        %196 = sbr.rel (%p194) target = $region36
      $region35: #{tpu_custom_call.1} parent=31 // pred_region
        %p197 = scmp.lt.s32.totalorder %s18, 1
        %s198 = scalar_select %p197, %s18, 1
        %p199 = scmp.lt.s32.totalorder %s19, 0
        %s200 = scalar_select %p199, %s19, 0
        %s201 = smul.addr %s198, 4
        %s202 = sadd.s32 %s200, %s201
        %s203 = smul.addr %s202, 8
        %s204 = scalar_lea.vmem %s0, %s203
      $region36: #{tpu_custom_call.1} parent=31 // pred_fallthru
        _
    $region32: #{tpu_custom_call.1} parent=5 // pred_fallthru
      _
    %p205 = scmp.le.s32.totalorder 1, %s11
    %p206 = scmp.lt.s32.totalorder %s11, 3
    %p207 = pnand %p205, %p206
    %p208 = pneg %p207
    // Predicated region
    $region37: #{tpu_custom_call.1} parent=5 // pred_check
      _
    $region38: #{tpu_custom_call.1} parent=5 // pred_check_branch
      %210 = sbr.rel (%p207) target = $region40
    $region39: #{tpu_custom_call.1} parent=5 // pred_region
      %s211 = ssub.s32 %s11, 1
      %p212 = scmp.lt.s32.totalorder %s20, 1
      %s213 = scalar_select %p212, %s20, 1
      %p214 = scmp.lt.s32.totalorder %s21, 0
      %s215 = scalar_select %p214, %s21, 0
      %s216 = smul.addr %s213, 4
      %s217 = sadd.s32 %s215, %s216
      %s218 = smul.addr %s217, 8
      %s219 = scalar_lea.vmem %s0, %s218
      %p220 = pneg %p51
      %p221 = pneg %p48
      %p222 = pneg %p72
      %p223 = pneg %p69
      %p224 = pneg %p93
      %p225 = pneg %p90
      %p226 = pneg %p114
      %p227 = pneg %p111
      %p228 = pneg %p135
      %p229 = pneg %p132
      %p230 = pneg %p163
      %p231 = pneg %p160
      %p232 = scmp.lt.s32.totalorder %s20, 1
      %s233 = scalar_select %p232, %s20, 1
      %p234 = scmp.lt.s32.totalorder %s21, 0
      %s235 = scalar_select %p234, %s21, 0
      %s236 = smul.addr %s233, 4
      %s237 = sadd.s32 %s235, %s236
      %s238 = smul.addr %s237, 8
      %s239 = scalar_lea.vmem %s5, %s238
      %p240 = scmp.lt.s32.totalorder %s20, 1
      %s241 = scalar_select %p240, %s20, 1
      %p242 = scmp.lt.s32.totalorder %s21, 0
      %s243 = scalar_select %p242, %s21, 0
      %s244 = smul.addr %s241, 4
      %s245 = sadd.s32 %s243, %s244
      %s246 = smul.addr %s245, 8
      %s247 = scalar_lea.vmem %s0, %s246
      %p248 = scmp.lt.s32.totalorder %s20, 1
      %s249 = scalar_select %p248, %s20, 1
      %p250 = scmp.lt.s32.totalorder %s21, 0
      %s251 = scalar_select %p250, %s21, 0
      %s252 = smul.addr %s249, 4
      %s253 = sadd.s32 %s251, %s252
      %s254 = smul.addr %s253, 8
      %s255 = scalar_lea.vmem %s5, %s254
      %v256 = vld [vmem:[%s247] sm:$0xff]
      %v257 = vld [vmem:[%s247 + $0x8] sm:$0xff]
      %v258 = vld [vmem:[%s247 + $0x10] sm:$0xff]
      %v259 = vld [vmem:[%s247 + $0x18] sm:$0xff]
      %v260 = vld [vmem:[%s1] sm:$0xff]
      %v261 = vld [vmem:[%s1 + $0x8] sm:$0xff]
      %v262 = vld [vmem:[%s1 + $0x10] sm:$0xff]
      %v263 = vld [vmem:[%s1 + $0x18] sm:$0xff]
      %v264 = vld [vmem:[%s2] sm:$0xff]
      %v265 = vld [vmem:[%s2 + $0x8] sm:$0xff]
      %v266 = vld [vmem:[%s2 + $0x10] sm:$0xff]
      %v267 = vld [vmem:[%s2 + $0x18] sm:$0xff]
      %269 = vset.pattern.permute.xlu0 0
      %270 = vperm.xlu0 %269, %v264
      %v271 = vpop.permute.xlu0 %270
      %274 = vset.pattern.permute.xlu0 0
      %275 = vperm.xlu0 %274, %v265
      %v276 = vpop.permute.xlu0 %275
      %279 = vset.pattern.permute.xlu0 0
      %280 = vperm.xlu0 %279, %v266
      %v281 = vpop.permute.xlu0 %280
      %284 = vset.pattern.permute.xlu0 0
      %285 = vperm.xlu0 %284, %v267
      %v286 = vpop.permute.xlu0 %285
      %vm288 = vcmask 261120
      %v290 = vsel %vm288, %v260, 0
      %v293 = vsel %vm288, %v261, 0
      %v296 = vsel %vm288, %v262, 0
      %v299 = vsel %vm288, %v263, 0
      %301 = vmatprep.subr.mxu0 0.0
      %302 = vmatpush1.msra.mxu0 %v256
      %303 = vmatprep.subr.mxu0 0.0
      %304 = vmatpush1.msra.mxu0 %v257
      %305 = vmatprep.subr.mxu0 0.0
      %306 = vmatpush1.msra.mxu0 %v258
      %307 = vmatprep.subr.mxu0 0.0
      %308 = vmatpush1.msra.mxu0 %v259
      %309 = vmatprep.subr.mxu0 0.0
      %310 = vmatpush1.msra.mxu0 0.0
      %311 = vmatprep.subr.mxu0 0.0
      %312 = vmatpush1.msra.mxu0 0.0
      %313 = vmatprep.subr.mxu0 0.0
      %314 = vmatpush1.msra.mxu0 0.0
      %315 = vmatprep.subr.mxu0 0.0
      %316 = vmatpush1.msra.mxu0 0.0
      %317 = vmatprep.subr.mxu0 0.0
      %318 = vmatpush1.msra.mxu0 0.0
      %319 = vmatprep.subr.mxu0 0.0
      %320 = vmatpush1.msra.mxu0 0.0
      %321 = vmatprep.subr.mxu0 0.0
      %322 = vmatpush1.msra.mxu0 0.0
      %323 = vmatprep.subr.mxu0 0.0
      %324 = vmatpush1.msra.mxu0 0.0
      %325 = vmatprep.subr.mxu0 0.0
      %326 = vmatpush1.msra.mxu0 0.0
      %327 = vmatprep.subr.mxu0 0.0
      %328 = vmatpush1.msra.mxu0 0.0
      %329 = vmatprep.subr.mxu0 0.0
      %330 = vmatpush1.msra.mxu0 0.0
      %331 = vmatprep.subr.mxu0 0.0
      %332 = vmatpush1.msra.mxu0 0.0
      %333 = vmatprep.subr.mxu0 0.0
      %334 = vmatpush1.msra.mxu0 0.0
      %335 = vmatprep.subr.mxu0 0.0
      %336 = vmatpush1.msra.mxu0 0.0
      %337 = vmatprep.subr.mxu0 0.0
      %338 = vmatpush1.msra.mxu0 0.0
      %339 = vmatprep.subr.mxu0 0.0
      %340 = vmatpush1.msra.mxu0 0.0
      %341 = vmatprep.subr.mxu0 0.0
      %342 = vmatpush1.msra.mxu0 0.0
      %343 = vmatprep.subr.mxu0 0.0
      %344 = vmatpush1.msra.mxu0 0.0
      %345 = vmatprep.subr.mxu0 0.0
      %346 = vmatpush1.msra.mxu0 0.0
      %347 = vmatprep.subr.mxu0 0.0
      %348 = vmatpush1.msra.mxu0 0.0
      %349 = vmatprep.subr.mxu0 0.0
      %350 = vmatpush1.msra.mxu0 0.0
      %351 = vmatprep.subr.mxu0 0.0
      %352 = vmatpush1.msra.mxu0 0.0
      %353 = vmatprep.subr.mxu0 0.0
      %354 = vmatpush1.msra.mxu0 0.0
      %355 = vmatprep.subr.mxu0 0.0
      %356 = vmatpush1.msra.mxu0 0.0
      %357 = vmatprep.subr.mxu0 0.0
      %358 = vmatpush1.msra.mxu0 0.0
      %359 = vmatprep.subr.mxu0 0.0
      %360 = vmatpush1.msra.mxu0 0.0
      %361 = vmatprep.subr.mxu0 0.0
      %362 = vmatpush1.msra.mxu0 0.0
      %363 = vmatprep.subr.mxu0 0.0
      %364 = vmatpush1.msra.mxu0 0.0
      %365 = vmatprep.mubr.f32.mxu0 0.0
      %366 = vmatmul.mubr.f32.gmra.mrb[0].mxu0 %v290
      %v367 = vpop.f32.mrb[0].mxu0
      %v368 = vadd.f32 %v271, %v367
      %v369 = vpop.f32.mrb[0].mxu0
      %370 = vmatprep.mubr.f32.mxu0 0.0
      %371 = vmatmul.mubr.f32.gmra.mrb[0].mxu0 %v293
      %v372 = vpop.f32.mrb[0].mxu0
      %v373 = vadd.f32 %v276, %v372
      %v374 = vpop.f32.mrb[0].mxu0
      %375 = vmatprep.mubr.f32.mxu0 0.0
      %376 = vmatmul.mubr.f32.gmra.mrb[0].mxu0 %v296
      %v377 = vpop.f32.mrb[0].mxu0
      %v378 = vadd.f32 %v281, %v377
      %v379 = vpop.f32.mrb[0].mxu0
      %380 = vmatprep.mubr.f32.mxu0 0.0
      %381 = vmatmul.mubr.f32.gmra.mrb[0].mxu0 %v299
      %v382 = vpop.f32.mrb[0].mxu0
      %v383 = vadd.f32 %v286, %v382
      %v384 = vpop.f32.mrb[0].mxu0
      %385 = vdwg.mxu0
      %v386 = vmax.f32 %v368, 0.0
      %v387 = vmax.f32 %v373, 0.0
      %v388 = vmax.f32 %v378, 0.0
      %v389 = vmax.f32 %v383, 0.0
      %v390 = vld [vmem:[%s3] sm:$0xff]
      %v391 = vld [vmem:[%s3 + $0x8] sm:$0xff]
      %v392 = vld [vmem:[%s3 + $0x10] sm:$0xff]
      %v393 = vld [vmem:[%s3 + $0x18] sm:$0xff]
      %v394 = vld [vmem:[%s4] sm:$0xff]
      %v395 = vld [vmem:[%s4 + $0x8] sm:$0xff]
      %v396 = vld [vmem:[%s4 + $0x10] sm:$0xff]
      %v397 = vld [vmem:[%s4 + $0x18] sm:$0xff]
      %399 = vset.pattern.permute.xlu0 0
      %400 = vperm.xlu0 %399, %v394
      %v401 = vpop.permute.xlu0 %400
      %404 = vset.pattern.permute.xlu0 0
      %405 = vperm.xlu0 %404, %v395
      %v406 = vpop.permute.xlu0 %405
      %409 = vset.pattern.permute.xlu0 0
      %410 = vperm.xlu0 %409, %v396
      %v411 = vpop.permute.xlu0 %410
      %414 = vset.pattern.permute.xlu0 0
      %415 = vperm.xlu0 %414, %v397
      %v416 = vpop.permute.xlu0 %415
      %v418 = vadd.f32 %v256, %v401
      %v419 = vadd.f32 %v257, %v406
      %v420 = vadd.f32 %v258, %v411
      %v421 = vadd.f32 %v259, %v416
      %v423 = vsel %vm288, %v390, 0
      %v426 = vsel %vm288, %v391, 0
      %v429 = vsel %vm288, %v392, 0
      %v432 = vsel %vm288, %v393, 0
      %434 = vmatprep.subr.mxu0 0.0
      %435 = vmatpush1.msra.mxu0 %v386
      %436 = vmatprep.subr.mxu0 0.0
      %437 = vmatpush1.msra.mxu0 %v387
      %438 = vmatprep.subr.mxu0 0.0
      %439 = vmatpush1.msra.mxu0 %v388
      %440 = vmatprep.subr.mxu0 0.0
      %441 = vmatpush1.msra.mxu0 %v389
      %442 = vmatprep.subr.mxu0 0.0
      %443 = vmatpush1.msra.mxu0 0.0
      %444 = vmatprep.subr.mxu0 0.0
      %445 = vmatpush1.msra.mxu0 0.0
      %446 = vmatprep.subr.mxu0 0.0
      %447 = vmatpush1.msra.mxu0 0.0
      %448 = vmatprep.subr.mxu0 0.0
      %449 = vmatpush1.msra.mxu0 0.0
      %450 = vmatprep.subr.mxu0 0.0
      %451 = vmatpush1.msra.mxu0 0.0
      %452 = vmatprep.subr.mxu0 0.0
      %453 = vmatpush1.msra.mxu0 0.0
      %454 = vmatprep.subr.mxu0 0.0
      %455 = vmatpush1.msra.mxu0 0.0
      %456 = vmatprep.subr.mxu0 0.0
      %457 = vmatpush1.msra.mxu0 0.0
      %458 = vmatprep.subr.mxu0 0.0
      %459 = vmatpush1.msra.mxu0 0.0
      %460 = vmatprep.subr.mxu0 0.0
      %461 = vmatpush1.msra.mxu0 0.0
      %462 = vmatprep.subr.mxu0 0.0
      %463 = vmatpush1.msra.mxu0 0.0
      %464 = vmatprep.subr.mxu0 0.0
      %465 = vmatpush1.msra.mxu0 0.0
      %466 = vmatprep.subr.mxu0 0.0
      %467 = vmatpush1.msra.mxu0 0.0
      %468 = vmatprep.subr.mxu0 0.0
      %469 = vmatpush1.msra.mxu0 0.0
      %470 = vmatprep.subr.mxu0 0.0
      %471 = vmatpush1.msra.mxu0 0.0
      %472 = vmatprep.subr.mxu0 0.0
      %473 = vmatpush1.msra.mxu0 0.0
      %474 = vmatprep.subr.mxu0 0.0
      %475 = vmatpush1.msra.mxu0 0.0
      %476 = vmatprep.subr.mxu0 0.0
      %477 = vmatpush1.msra.mxu0 0.0
      %478 = vmatprep.subr.mxu0 0.0
      %479 = vmatpush1.msra.mxu0 0.0
      %480 = vmatprep.subr.mxu0 0.0
      %481 = vmatpush1.msra.mxu0 0.0
      %482 = vmatprep.subr.mxu0 0.0
      %483 = vmatpush1.msra.mxu0 0.0
      %484 = vmatprep.subr.mxu0 0.0
      %485 = vmatpush1.msra.mxu0 0.0
      %486 = vmatprep.subr.mxu0 0.0
      %487 = vmatpush1.msra.mxu0 0.0
      %488 = vmatprep.subr.mxu0 0.0
      %489 = vmatpush1.msra.mxu0 0.0
      %490 = vmatprep.subr.mxu0 0.0
      %491 = vmatpush1.msra.mxu0 0.0
      %492 = vmatprep.subr.mxu0 0.0
      %493 = vmatpush1.msra.mxu0 0.0
      %494 = vmatprep.subr.mxu0 0.0
      %495 = vmatpush1.msra.mxu0 0.0
      %496 = vmatprep.subr.mxu0 0.0
      %497 = vmatpush1.msra.mxu0 0.0
      %498 = vmatprep.mubr.f32.mxu0 0.0
      %499 = vmatmul.mubr.f32.gmra.mrb[0].mxu0 %v423
      %v500 = vpop.f32.mrb[0].mxu0
      %v501 = vadd.f32 %v418, %v500
      %v502 = vpop.f32.mrb[0].mxu0
      %503 = vmatprep.mubr.f32.mxu0 0.0
      %504 = vmatmul.mubr.f32.gmra.mrb[0].mxu0 %v426
      %v505 = vpop.f32.mrb[0].mxu0
      %v506 = vadd.f32 %v419, %v505
      %v507 = vpop.f32.mrb[0].mxu0
      %508 = vmatprep.mubr.f32.mxu0 0.0
      %509 = vmatmul.mubr.f32.gmra.mrb[0].mxu0 %v429
      %v510 = vpop.f32.mrb[0].mxu0
      %v511 = vadd.f32 %v420, %v510
      %v512 = vpop.f32.mrb[0].mxu0
      %513 = vmatprep.mubr.f32.mxu0 0.0
      %514 = vmatmul.mubr.f32.gmra.mrb[0].mxu0 %v432
      %v515 = vpop.f32.mrb[0].mxu0
      %v516 = vadd.f32 %v421, %v515
      %v517 = vpop.f32.mrb[0].mxu0
      %518 = vdwg.mxu0
      %vm519 = vcmask 130048
      %520 = vst.msk [vmem:[%s255] sm:$0xff] %vm519, %v501
      %521 = vst.msk [vmem:[%s255 + $0x8] sm:$0xff] %vm519, %v506
      %522 = vst.msk [vmem:[%s255 + $0x10] sm:$0xff] %vm519, %v511
      %523 = vst.msk [vmem:[%s255 + $0x18] sm:$0xff] %vm519, %v516
      %p524 = scmp.lt.s32.totalorder %s20, 1
      %s525 = scalar_select %p524, %s20, 1
      %p526 = scmp.lt.s32.totalorder %s21, 0
      %s527 = scalar_select %p526, %s21, 0
      %s528 = smul.addr %s525, 4
      %s529 = sadd.s32 %s527, %s528
      %s530 = smul.addr %s529, 8
      %s531 = scalar_lea.vmem %s5, %s530
      // Predicated region
      $region41: #{tpu_custom_call.1} parent=39 // pred_check
        %p532 = pneg %p160
      $region42: #{tpu_custom_call.1} parent=39 // pred_check_branch
        %534 = sbr.rel (%p532) target = $region44
      $region43: #{tpu_custom_call.1} parent=39 // pred_region
        _
      $region44: #{tpu_custom_call.1} parent=39 // pred_fallthru
        _
    $region40: #{tpu_custom_call.1} parent=5 // pred_fallthru
      _
    %p535 = scmp.le.s32.totalorder 2, %s11
    // Predicated region
    $region45: #{tpu_custom_call.1} parent=5 // pred_check
      %p536 = pneg %p535
    $region46: #{tpu_custom_call.1} parent=5 // pred_check_branch
      %538 = sbr.rel (%p536) target = $region48
    $region47: #{tpu_custom_call.1} parent=5 // pred_region
      %s539 = ssub.s32 %s11, 2
      // Predicated region
      $region49: #{tpu_custom_call.1} parent=47 // pred_check
        %p540 = pneg %p166
      $region50: #{tpu_custom_call.1} parent=47 // pred_check_branch
        %542 = sbr.rel (%p540) target = $region52
      $region51: #{tpu_custom_call.1} parent=47 // pred_region
        %p543 = scmp.lt.s32.totalorder %s22, 1
        %s544 = scalar_select %p543, %s22, 1
        %p545 = scmp.lt.s32.totalorder %s23, 0
        %s546 = scalar_select %p545, %s23, 0
        %s547 = smul.addr %s544, 4
        %s548 = sadd.s32 %s546, %s547
        %s549 = smul.addr %s548, 8
        %s550 = scalar_lea.vmem %s5, %s549
      $region52: #{tpu_custom_call.1} parent=47 // pred_fallthru
        _
    $region48: #{tpu_custom_call.1} parent=5 // pred_fallthru
      _
  $region6: #{tpu_custom_call.1} parent=0 // loop_footer
    %s15 = sadd.s32 1, %s11
  $region7: #{tpu_custom_call.1} parent=0 // loop_footer_branch
    %10 = sbr.rel target = $region3
  $region8: #{tpu_custom_call.1} parent=0 // loop_exit
    _

</llo_original>
